<compile_context>
chip_gen: v6e
topology: v6e:2x2x1
jax: 0.10.0
libtpu: 0.0.40
codegen_flags: <defaults>
</compile_context>

<pallas_src>
import jax
import jax.numpy as jnp
from jax.experimental import pallas as pl
from jax.experimental.pallas import tpu as pltpu


def _round_up(x, m):
    return (x + m - 1) // m * m


def _tensorcores_per_chip():
    """2 on v7x (two TensorCores/chip), 1 on v5e/v6e (and as a safe default)."""
    try:
        kind = jax.devices()[0].device_kind.lower()
    except Exception:
        return 1
    return 2 if "v7" in kind else 1


def _auto_block_rows(batch):
    # One row block per TensorCore: single grid step on v5e/v6e, 2-way split
    # on v7x.  Cap the block so very large batches still pipeline.
    n_tc = _tensorcores_per_chip()
    br = _round_up(pl.cdiv(batch, n_tc), 16)
    return max(16, min(br, 1024))


def _vmem_bytes_estimate(br, sd, hidden, out_dim, in_itemsize, out_itemsize):
    lane = lambda n: _round_up(n, 128)
    dbuf = 2  # Pallas double-buffers every BlockSpec by default.
    inputs = dbuf * 2 * br * lane(sd) * in_itemsize            # two row streams
    weights = dbuf * (_round_up(sd, 16) * lane(hidden)
                      + _round_up(hidden, 16) * lane(out_dim)) * 2  # bf16
    biases = dbuf * 8 * (lane(hidden) + lane(out_dim)) * 4     # f32
    output = dbuf * br * lane(out_dim) * out_itemsize
    return inputs + weights + biases + output


def state_kernel(pre_ref, st_ref, w1a_ref, w1b_ref, b1_ref, w2_ref, b2_ref, o_ref):
    # fc1 on concat([pre, state], axis=1), expressed as two matmuls so no
    # lane-axis concat / XLU shuffle is needed.
    pre = pre_ref[...].astype(jnp.bfloat16)
    st = st_ref[...].astype(jnp.bfloat16)
    h = jnp.dot(pre, w1a_ref[...], preferred_element_type=jnp.float32)
    h = h + jnp.dot(st, w1b_ref[...], preferred_element_type=jnp.float32)
    h = jnp.maximum(h + b1_ref[...], 0.0)            # bias + ReLU in f32 (VPU)
    # fc2 + ReLU
    y = jnp.dot(h.astype(jnp.bfloat16), w2_ref[...],
                preferred_element_type=jnp.float32)
    o_ref[...] = jnp.maximum(y + b2_ref[...], 0.0).astype(o_ref.dtype)


def prepare_params(w1, b1, w2, b2, state_dim):
    """One-time parameter prep (do NOT call per forward step).

    Splits fc1's (2*sd, hidden) weight row-wise and stores matmul operands in
    bf16 so the per-call wrapper does no slicing/casting work.
    NOTE: bf16 MXU operands (with f32 accumulation) deviate slightly from the
    pure-f32 PyTorch module — an explicit, accepted precision choice.
    """
    return dict(
        w1a=jnp.asarray(w1[:state_dim, :], jnp.bfloat16),
        w1b=jnp.asarray(w1[state_dim:, :], jnp.bfloat16),
        b1=jnp.asarray(b1, jnp.float32),
        w2=jnp.asarray(w2, jnp.bfloat16),
        b2=jnp.asarray(b2, jnp.float32),
    )


def state_forward(pre_state, state, params, *, block_rows=None,
                  out_dtype=jnp.float32):
    """y = relu(relu(concat([pre_state, state], 1) @ w1 + b1) @ w2 + b2).

    pre_state / state: (B, state_dim).  bf16 inputs are accepted as-is (the
    kernel casts internally); no wrapper-side astype is added.
    """
    B, sd = pre_state.shape
    hidden = params["w1a"].shape[1]
    out_dim = params["w2"].shape[1]

    br = _auto_block_rows(B) if block_rows is None else max(16, _round_up(block_rows, 16))
    grid = (pl.cdiv(B, br),)   # ragged last block is masked by Pallas; no pad

    row_spec = lambda cols: pl.BlockSpec((br, cols), lambda i: (i, 0))
    const_spec = lambda shape: pl.BlockSpec(shape, lambda i: (0, 0))

    vmem_limit = max(8 * 1024 * 1024,
                     2 * _vmem_bytes_estimate(br, sd, hidden, out_dim,
                                              pre_state.dtype.itemsize,
                                              jnp.dtype(out_dtype).itemsize))

    # TODO(synk): set pipeline_mode=pl.Buffered(1) on the constant weight specs
    # if hidden/state_dim ever grow enough for weight double-buffering to matter.
    return pl.pallas_call(
        state_kernel,
        out_shape=jax.ShapeDtypeStruct((B, out_dim), out_dtype),
        grid=grid,
        in_specs=[
            row_spec(sd),                        # pre_state rows
            row_spec(sd),                        # state rows
            const_spec(params["w1a"].shape),     # weights/biases: constant
            const_spec(params["w1b"].shape),     # index_map -> VMEM-resident
            const_spec(params["b1"].shape),
            const_spec(params["w2"].shape),
            const_spec(params["b2"].shape),
        ],
        out_specs=row_spec(out_dim),
        compiler_params=pltpu.CompilerParams(
            dimension_semantics=("parallel",),   # lights up 2nd TC on v7x
            vmem_limit_bytes=int(vmem_limit),
        ),
    )(pre_state, state, params["w1a"], params["w1b"], params["b1"],
      params["w2"], params["b2"])


def init_params(key, state_dim, state_digest_dim=32):
    k1, k2, k3, k4 = jax.random.split(key, 4)
    in1, out1 = state_dim * 2, state_dim * 8
    in2, out2 = state_dim * 8, state_digest_dim
    # fc weights ~ N(0, 0.1) as in the PyTorch module (stored as (in, out)).
    w1 = 0.1 * jax.random.normal(k1, (in1, out1), jnp.float32)
    w2 = 0.1 * jax.random.normal(k2, (in2, out2), jnp.float32)
    # biases: PyTorch default Linear bias init U(-1/sqrt(in), 1/sqrt(in)).
    bound1 = 1.0 / jnp.sqrt(jnp.float32(in1))
    bound2 = 1.0 / jnp.sqrt(jnp.float32(in2))
    b1 = jax.random.uniform(k3, (1, out1), jnp.float32, -bound1, bound1)
    b2 = jax.random.uniform(k4, (1, out2), jnp.float32, -bound2, bound2)
    return w1, b1, w2, b2


def _reference(pre_state, state, w1, b1, w2, b2):
    x = jnp.concatenate([pre_state, state], axis=1)
    h = jnp.maximum(
        jnp.dot(x.astype(jnp.bfloat16), w1.astype(jnp.bfloat16),
                preferred_element_type=jnp.float32) + b1, 0.0)
    out = jnp.maximum(
        jnp.dot(h.astype(jnp.bfloat16), w2.astype(jnp.bfloat16),
                preferred_element_type=jnp.float32) + b2, 0.0)
    ref_f32 = jnp.maximum(jnp.maximum(x @ w1 + b1, 0.0) @ w2 + b2, 0.0)
    return out, ref_f32


if __name__ == "__main__":
    state_dim = 16           # concat dim 32, hidden 128, digest 32
    state_digest_dim = 32
    batch = 64               # small, sublane-friendly batch

    key = jax.random.PRNGKey(0)
    kp, ks, kw, kr = jax.random.split(key, 4)
    pre_state = jax.random.normal(kp, (batch, state_dim), jnp.float32)
    state = jax.random.normal(ks, (batch, state_dim), jnp.float32)
    w1, b1, w2, b2 = init_params(kw, state_dim, state_digest_dim)

    params = prepare_params(w1, b1, w2, b2, state_dim)  # one-time prep

    # 1) auto block sizing (single step on v5e/v6e, 2-way on v7x)
    out = state_forward(pre_state, state, params)
    jax.block_until_ready(out)
    assert out.shape == (batch, state_digest_dim)

    ref_bf16, ref_f32 = _reference(pre_state, state, w1, b1, w2, b2)
    assert jnp.allclose(out, ref_bf16, atol=2e-3, rtol=2e-3)
    assert jnp.allclose(out, ref_f32, atol=5e-2, rtol=5e-2)

    # 2) ragged batch exercising masked last block (no pad path anymore)
    kp2, ks2 = jax.random.split(kr)
    pre2 = jax.random.normal(kp2, (40, state_dim), jnp.float32)
    st2 = jax.random.normal(ks2, (40, state_dim), jnp.float32)
    out2 = state_forward(pre2, st2, params, block_rows=16)
    jax.block_until_ready(out2)
    ref2_bf16, ref2_f32 = _reference(pre2, st2, w1, b1, w2, b2)
    assert out2.shape == (40, state_digest_dim)
    assert jnp.allclose(out2, ref2_bf16, atol=2e-3, rtol=2e-3)
    assert jnp.allclose(out2, ref2_f32, atol=5e-2, rtol=5e-2)

    print("KERNEL_OK")
</pallas_src>

<mosaic_0001>
module attributes {stable_mosaic.version = 11 : i64} {
  func.func @state_kernel(%arg0: i32, %arg1: memref<64x16xf32, #tpu.memory_space<vmem>>, %arg2: memref<64x16xf32, #tpu.memory_space<vmem>>, %arg3: memref<16x128xbf16, #tpu.memory_space<vmem>>, %arg4: memref<16x128xbf16, #tpu.memory_space<vmem>>, %arg5: memref<1x128xf32, #tpu.memory_space<vmem>>, %arg6: memref<128x32xbf16, #tpu.memory_space<vmem>>, %arg7: memref<1x32xf32, #tpu.memory_space<vmem>>, %arg8: memref<64x32xf32, #tpu.memory_space<vmem>>) attributes {dimension_semantics = [#tpu.dimension_semantics<parallel>], iteration_bounds = array<i64: 1>, scalar_prefetch = 0 : i64, scratch_operands = 0 : i64, tpu.core_type = #tpu.core_type<tc>, window_params = [{transform_indices = @transform_0, window_bounds = array<i64: 64, 16>}, {transform_indices = @transform_1, window_bounds = array<i64: 64, 16>}, {pipeline_mode = #tpu.pipeline_mode<synchronous>, transform_indices = @transform_2, window_bounds = array<i64: 16, 128>}, {pipeline_mode = #tpu.pipeline_mode<synchronous>, transform_indices = @transform_3, window_bounds = array<i64: 16, 128>}, {pipeline_mode = #tpu.pipeline_mode<synchronous>, transform_indices = @transform_4, window_bounds = array<i64: 1, 128>}, {pipeline_mode = #tpu.pipeline_mode<synchronous>, transform_indices = @transform_5, window_bounds = array<i64: 128, 32>}, {pipeline_mode = #tpu.pipeline_mode<synchronous>, transform_indices = @transform_6, window_bounds = array<i64: 1, 32>}, {transform_indices = @transform_7, window_bounds = array<i64: 64, 32>}]} {
    %c0 = arith.constant 0 : index
    %c0_0 = arith.constant 0 : index
    %0 = vector.load %arg1[%c0, %c0_0] : memref<64x16xf32, #tpu.memory_space<vmem>>, vector<64x16xf32>
    %1 = arith.truncf %0 : vector<64x16xf32> to vector<64x16xbf16>
    %c0_1 = arith.constant 0 : index
    %c0_2 = arith.constant 0 : index
    %2 = vector.load %arg2[%c0_1, %c0_2] : memref<64x16xf32, #tpu.memory_space<vmem>>, vector<64x16xf32>
    %3 = arith.truncf %2 : vector<64x16xf32> to vector<64x16xbf16>
    %c0_3 = arith.constant 0 : index
    %c0_4 = arith.constant 0 : index
    %4 = vector.load %arg3[%c0_3, %c0_4] : memref<16x128xbf16, #tpu.memory_space<vmem>>, vector<16x128xbf16>
    %cst = arith.constant dense<0.000000e+00> : vector<64x128xf32>
    %5 = tpu.matmul %1, %4, %cst {dimension_numbers = #tpu.dot_dimension_numbers<[1], [0], [0], [1], [0, 0, 1, 1], [], []>} : vector<64x16xbf16>, vector<16x128xbf16>, vector<64x128xf32> -> vector<64x128xf32>
    %c0_5 = arith.constant 0 : index
    %c0_6 = arith.constant 0 : index
    %6 = vector.load %arg4[%c0_5, %c0_6] : memref<16x128xbf16, #tpu.memory_space<vmem>>, vector<16x128xbf16>
    %cst_7 = arith.constant dense<0.000000e+00> : vector<64x128xf32>
    %7 = tpu.matmul %3, %6, %cst_7 {dimension_numbers = #tpu.dot_dimension_numbers<[1], [0], [0], [1], [0, 0, 1, 1], [], []>} : vector<64x16xbf16>, vector<16x128xbf16>, vector<64x128xf32> -> vector<64x128xf32>
    %8 = arith.addf %5, %7 : vector<64x128xf32>
    %c0_8 = arith.constant 0 : index
    %c0_9 = arith.constant 0 : index
    %9 = vector.load %arg5[%c0_8, %c0_9] : memref<1x128xf32, #tpu.memory_space<vmem>>, vector<1x128xf32>
    %10 = vector.broadcast %9 : vector<1x128xf32> to vector<64x128xf32>
    %11 = arith.addf %8, %10 : vector<64x128xf32>
    %cst_10 = arith.constant 0.000000e+00 : f32
    %12 = vector.broadcast %cst_10 : f32 to vector<64x128xf32>
    %13 = arith.maximumf %11, %12 : vector<64x128xf32>
    %14 = arith.truncf %13 : vector<64x128xf32> to vector<64x128xbf16>
    %c0_11 = arith.constant 0 : index
    %c0_12 = arith.constant 0 : index
    %15 = vector.load %arg6[%c0_11, %c0_12] : memref<128x32xbf16, #tpu.memory_space<vmem>>, vector<128x32xbf16>
    %cst_13 = arith.constant dense<0.000000e+00> : vector<64x32xf32>
    %16 = tpu.matmul %14, %15, %cst_13 {dimension_numbers = #tpu.dot_dimension_numbers<[1], [0], [0], [1], [0, 0, 1, 1], [], []>} : vector<64x128xbf16>, vector<128x32xbf16>, vector<64x32xf32> -> vector<64x32xf32>
    %c0_14 = arith.constant 0 : index
    %c0_15 = arith.constant 0 : index
    %17 = vector.load %arg7[%c0_14, %c0_15] : memref<1x32xf32, #tpu.memory_space<vmem>>, vector<1x32xf32>
    %18 = vector.broadcast %17 : vector<1x32xf32> to vector<64x32xf32>
    %19 = arith.addf %16, %18 : vector<64x32xf32>
    %cst_16 = arith.constant 0.000000e+00 : f32
    %20 = vector.broadcast %cst_16 : f32 to vector<64x32xf32>
    %21 = arith.maximumf %19, %20 : vector<64x32xf32>
    %c0_17 = arith.constant 0 : index
    %c0_18 = arith.constant 0 : index
    %22 = vector.load %arg8[%c0_17, %c0_18] : memref<64x32xf32, #tpu.memory_space<vmem>>, vector<64x32xf32>
    tpu.vector_store %arg8[%c0_17, %c0_18], %21 {strides = array<i32>} : memref<64x32xf32, #tpu.memory_space<vmem>>, vector<64x32xf32>,
    return
  }
  func.func @transform_0(%arg0: i32) -> (i32, i32) {
    %c0_i32 = arith.constant 0 : i32
    %c0_i32_0 = arith.constant 0 : i32
    return %arg0, %c0_i32 : i32, i32
  }
  func.func @transform_1(%arg0: i32) -> (i32, i32) {
    %c0_i32 = arith.constant 0 : i32
    %c0_i32_0 = arith.constant 0 : i32
    return %arg0, %c0_i32 : i32, i32
  }
  func.func @transform_2(%arg0: i32) -> (i32, i32) {
    %c0_i32 = arith.constant 0 : i32
    %c0_i32_0 = arith.constant 0 : i32
    %c0_i32_1 = arith.constant 0 : i32
    return %c0_i32, %c0_i32_0 : i32, i32
  }
  func.func @transform_3(%arg0: i32) -> (i32, i32) {
    %c0_i32 = arith.constant 0 : i32
    %c0_i32_0 = arith.constant 0 : i32
    %c0_i32_1 = arith.constant 0 : i32
    return %c0_i32, %c0_i32_0 : i32, i32
  }
  func.func @transform_4(%arg0: i32) -> (i32, i32) {
    %c0_i32 = arith.constant 0 : i32
    %c0_i32_0 = arith.constant 0 : i32
    %c0_i32_1 = arith.constant 0 : i32
    return %c0_i32, %c0_i32_0 : i32, i32
  }
  func.func @transform_5(%arg0: i32) -> (i32, i32) {
    %c0_i32 = arith.constant 0 : i32
    %c0_i32_0 = arith.constant 0 : i32
    %c0_i32_1 = arith.constant 0 : i32
    return %c0_i32, %c0_i32_0 : i32, i32
  }
  func.func @transform_6(%arg0: i32) -> (i32, i32) {
    %c0_i32 = arith.constant 0 : i32
    %c0_i32_0 = arith.constant 0 : i32
    %c0_i32_1 = arith.constant 0 : i32
    return %c0_i32, %c0_i32_0 : i32, i32
  }
  func.func @transform_7(%arg0: i32) -> (i32, i32) {
    %c0_i32 = arith.constant 0 : i32
    %c0_i32_0 = arith.constant 0 : i32
    return %arg0, %c0_i32 : i32, i32
  }
}

</mosaic_0001>

<llo_original>
// kernel: tpu_custom_call.1
$region0: #{tpu_custom_call.1}
  #allocation0 [shape = 'u32[]', space=smem, size = 0x4, offset = 0x4, fixed_abs, tag = 'smem constant byte address 0x4 - core index']
  #allocation1 [shape = 'u32[144,128]{1,0:T(1,128)}', space=vmem, size = 0x12000, scoped, tag = 'internal scratch']
  %s0 = inlined_call_operand.vmem [shape: f32[64,16], index: 0, kind: input, shape index: {}]
  %s1 = inlined_call_operand.vmem [shape: f32[64,16], index: 1, kind: input, shape index: {}]
  %s2 = inlined_call_operand.vmem [shape: bf16[16,128], index: 2, kind: input, shape index: {}]
  %s3 = inlined_call_operand.vmem [shape: bf16[16,128], index: 3, kind: input, shape index: {}]
  %s4 = inlined_call_operand.vmem [shape: f32[1,128], index: 4, kind: input, shape index: {}]
  %s5 = inlined_call_operand.vmem [shape: bf16[128,32], index: 5, kind: input, shape index: {}]
  %s6 = inlined_call_operand.vmem [shape: f32[1,32], index: 6, kind: input, shape index: {}]
  %s7 = inlined_call_operand.vmem [shape: f32[64,32], index: 7, kind: output, shape index: {}]
  %s8 = sld [smem:[#allocation0]]
  $region38: #{tpu_custom_call.1} parent=0
    _
  %s10 = ssub.s32 1, %s8
  %s11 = scalar_select 0, %s10, %s8
  // Predicated region
  $region2: #{tpu_custom_call.1} parent=0 // pred_check
    _
  $region3: #{tpu_custom_call.1} parent=0 // pred_check_branch
    %13 = sbr.rel (0) target = $region5
  $region4: #{tpu_custom_call.1} parent=0 // pred_region
    _
  $region5: #{tpu_custom_call.1} parent=0 // pred_fallthru
    _
  // Predicated region
  $region6: #{tpu_custom_call.1} parent=0 // pred_check
    _
  $region7: #{tpu_custom_call.1} parent=0 // pred_check_branch
    %15 = sbr.rel (0) target = $region9
  $region8: #{tpu_custom_call.1} parent=0 // pred_region
    _
  $region9: #{tpu_custom_call.1} parent=0 // pred_fallthru
    _
  // Predicated region
  $region10: #{tpu_custom_call.1} parent=0 // pred_check
    _
  $region11: #{tpu_custom_call.1} parent=0 // pred_check_branch
    %17 = sbr.rel (0) target = $region13
  $region12: #{tpu_custom_call.1} parent=0 // pred_region
    _
  $region13: #{tpu_custom_call.1} parent=0 // pred_fallthru
    _
  // Predicated region
  $region14: #{tpu_custom_call.1} parent=0 // pred_check
    _
  $region15: #{tpu_custom_call.1} parent=0 // pred_check_branch
    %19 = sbr.rel (0) target = $region17
  $region16: #{tpu_custom_call.1} parent=0 // pred_region
    _
  $region17: #{tpu_custom_call.1} parent=0 // pred_fallthru
    _
  // Predicated region
  $region18: #{tpu_custom_call.1} parent=0 // pred_check
    _
  $region19: #{tpu_custom_call.1} parent=0 // pred_check_branch
    %21 = sbr.rel (0) target = $region21
  $region20: #{tpu_custom_call.1} parent=0 // pred_region
    _
  $region21: #{tpu_custom_call.1} parent=0 // pred_fallthru
    _
  // Predicated region
  $region22: #{tpu_custom_call.1} parent=0 // pred_check
    _
  $region23: #{tpu_custom_call.1} parent=0 // pred_check_branch
    %23 = sbr.rel (0) target = $region25
  $region24: #{tpu_custom_call.1} parent=0 // pred_region
    _
  $region25: #{tpu_custom_call.1} parent=0 // pred_fallthru
    _
  // Predicated region
  $region26: #{tpu_custom_call.1} parent=0 // pred_check
    _
  $region27: #{tpu_custom_call.1} parent=0 // pred_check_branch
    %25 = sbr.rel (0) target = $region29
  $region28: #{tpu_custom_call.1} parent=0 // pred_region
    _
  $region29: #{tpu_custom_call.1} parent=0 // pred_fallthru
    _
  %v27 = vld [vmem:[%s0] sm:$0xff]
  %v28 = vld [vmem:[%s0 + $0x8] sm:$0xff]
  %v29 = vld [vmem:[%s0 + $0x10] sm:$0xff]
  %v30 = vld [vmem:[%s0 + $0x18] sm:$0xff]
  %v31 = vld [vmem:[%s0 + $0x20] sm:$0xff]
  %v32 = vld [vmem:[%s0 + $0x28] sm:$0xff]
  %v33 = vld [vmem:[%s0 + $0x30] sm:$0xff]
  %v34 = vld [vmem:[%s0 + $0x38] sm:$0xff]
  %v35 = vpack.c.bf16 %v28, %v27
  %v36 = vpack.c.bf16 %v30, %v29
  %v37 = vpack.c.bf16 %v32, %v31
  %v38 = vpack.c.bf16 %v34, %v33
  %v39 = vld [vmem:[%s1] sm:$0xff]
  %v40 = vld [vmem:[%s1 + $0x8] sm:$0xff]
  %v41 = vld [vmem:[%s1 + $0x10] sm:$0xff]
  %v42 = vld [vmem:[%s1 + $0x18] sm:$0xff]
  %v43 = vld [vmem:[%s1 + $0x20] sm:$0xff]
  %v44 = vld [vmem:[%s1 + $0x28] sm:$0xff]
  %v45 = vld [vmem:[%s1 + $0x30] sm:$0xff]
  %v46 = vld [vmem:[%s1 + $0x38] sm:$0xff]
  %v47 = vpack.c.bf16 %v40, %v39
  %v48 = vpack.c.bf16 %v42, %v41
  %v49 = vpack.c.bf16 %v44, %v43
  %v50 = vpack.c.bf16 %v46, %v45
  %v51 = vld [vmem:[%s2] sm:$0xf]
  %v52 = vld [vmem:[%s2 + $0x4] sm:$0xf]
  %v53 = vld [vmem:[%s3] sm:$0xf]
  %v54 = vld [vmem:[%s3 + $0x4] sm:$0xf]
  %v57 = vunpack.c.l.b16 %v53
  %v58 = vunpack.c.l.b16 %v54
  %v59 = vpack.c.b16 %v58, %v57
  %vm61 = vcmask 130048
  %v63 = vsel %vm61, %v47, 0
  %v66 = vsel %vm61, %v48, 0
  %v69 = vsel %vm61, %v49, 0
  %v72 = vsel %vm61, %v50, 0
  %74 = vmatprep.subr.bf16.mxu0 0
  %75 = vmatpush1.bf16.msra.mxu0 0
  %76 = vmatprep.subr.bf16.mxu0 0
  %77 = vmatpush1.bf16.msra.mxu0 0
  %78 = vmatprep.subr.bf16.mxu0 0
  %79 = vmatpush1.bf16.msra.mxu0 0
  %80 = vmatprep.subr.bf16.mxu0 0
  %81 = vmatpush1.bf16.msra.mxu0 0
  %82 = vmatprep.subr.bf16.mxu0 0
  %83 = vmatpush1.bf16.msra.mxu0 0
  %84 = vmatprep.subr.bf16.mxu0 0
  %85 = vmatpush1.bf16.msra.mxu0 0
  %86 = vmatprep.subr.bf16.mxu0 0
  %87 = vmatpush1.bf16.msra.mxu0 0
  %88 = vmatprep.subr.bf16.mxu0 0
  %89 = vmatpush1.bf16.msra.mxu0 %v59
  %90 = vmatprep.subr.bf16.mxu0 0
  %91 = vmatpush2.bf16.msra.mxu0 0
  %92 = vmatprep.subr.bf16.mxu0 0
  %93 = vmatpush2.bf16.msra.mxu0 0
  %94 = vmatprep.subr.bf16.mxu0 0
  %95 = vmatpush2.bf16.msra.mxu0 0
  %96 = vmatprep.subr.bf16.mxu0 0
  %97 = vmatpush2.bf16.msra.mxu0 0
  %98 = vmatprep.subr.bf16.mxu0 0
  %99 = vmatpush2.bf16.msra.mxu0 0
  %100 = vmatprep.subr.bf16.mxu0 0
  %101 = vmatpush2.bf16.msra.mxu0 0
  %102 = vmatprep.subr.bf16.mxu0 0
  %103 = vmatpush2.bf16.msra.mxu0 0
  %104 = vmatprep.subr.bf16.mxu0 0
  %105 = vmatpush2.bf16.msra.mxu0 0
  %106 = vmatprep.mubr.bf16.mxu0 0
  %107 = vmatmul.mubr.bf16.gmra.mxu0 %v63
  %v108 = vpop.f32.mrf.mxu0
  %v109 = vadd.f32 0.0, %v108
  %v110 = vpop.f32.mrf.mxu0
  %v111 = vpop.f32.mrf.mxu0
  %v112 = vadd.f32 0.0, %v111
  %v113 = vpop.f32.mrf.mxu0
  %114 = vmatprep.mubr.bf16.mxu0 0
  %115 = vmatmul.mubr.bf16.gmra.mxu0 %v66
  %v116 = vpop.f32.mrf.mxu0
  %v117 = vadd.f32 0.0, %v116
  %v118 = vpop.f32.mrf.mxu0
  %v119 = vpop.f32.mrf.mxu0
  %v120 = vadd.f32 0.0, %v119
  %v121 = vpop.f32.mrf.mxu0
  %122 = vmatprep.mubr.bf16.mxu0 0
  %123 = vmatmul.mubr.bf16.gmra.mxu0 %v69
  %v124 = vpop.f32.mrf.mxu0
  %v125 = vadd.f32 0.0, %v124
  %v126 = vpop.f32.mrf.mxu0
  %v127 = vpop.f32.mrf.mxu0
  %v128 = vadd.f32 0.0, %v127
  %v129 = vpop.f32.mrf.mxu0
  %130 = vmatprep.mubr.bf16.mxu0 0
  %131 = vmatmul.mubr.bf16.gmra.mxu0 %v72
  %v132 = vpop.f32.mrf.mxu0
  %v133 = vadd.f32 0.0, %v132
  %v134 = vpop.f32.mrf.mxu0
  %v135 = vpop.f32.mrf.mxu0
  %v136 = vadd.f32 0.0, %v135
  %v137 = vpop.f32.mrf.mxu0
  %138 = vdwg.mxu0
  %v141 = vunpack.c.l.b16 %v51
  %v142 = vunpack.c.l.b16 %v52
  %v143 = vpack.c.b16 %v142, %v141
  %v146 = vsel %vm61, %v35, 0
  %v149 = vsel %vm61, %v36, 0
  %v152 = vsel %vm61, %v37, 0
  %v155 = vsel %vm61, %v38, 0
  %157 = vmatprep.subr.bf16.mxu0 0
  %158 = vmatpush1.bf16.msra.mxu0 0
  %159 = vmatprep.subr.bf16.mxu0 0
  %160 = vmatpush1.bf16.msra.mxu0 0
  %161 = vmatprep.subr.bf16.mxu0 0
  %162 = vmatpush1.bf16.msra.mxu0 0
  %163 = vmatprep.subr.bf16.mxu0 0
  %164 = vmatpush1.bf16.msra.mxu0 0
  %165 = vmatprep.subr.bf16.mxu0 0
  %166 = vmatpush1.bf16.msra.mxu0 0
  %167 = vmatprep.subr.bf16.mxu0 0
  %168 = vmatpush1.bf16.msra.mxu0 0
  %169 = vmatprep.subr.bf16.mxu0 0
  %170 = vmatpush1.bf16.msra.mxu0 0
  %171 = vmatprep.subr.bf16.mxu0 0
  %172 = vmatpush1.bf16.msra.mxu0 %v143
  %173 = vmatprep.subr.bf16.mxu0 0
  %174 = vmatpush2.bf16.msra.mxu0 0
  %175 = vmatprep.subr.bf16.mxu0 0
  %176 = vmatpush2.bf16.msra.mxu0 0
  %177 = vmatprep.subr.bf16.mxu0 0
  %178 = vmatpush2.bf16.msra.mxu0 0
  %179 = vmatprep.subr.bf16.mxu0 0
  %180 = vmatpush2.bf16.msra.mxu0 0
  %181 = vmatprep.subr.bf16.mxu0 0
  %182 = vmatpush2.bf16.msra.mxu0 0
  %183 = vmatprep.subr.bf16.mxu0 0
  %184 = vmatpush2.bf16.msra.mxu0 0
  %185 = vmatprep.subr.bf16.mxu0 0
  %186 = vmatpush2.bf16.msra.mxu0 0
  %187 = vmatprep.subr.bf16.mxu0 0
  %188 = vmatpush2.bf16.msra.mxu0 0
  %189 = vmatprep.mubr.bf16.mxu0 0
  %190 = vmatmul.mubr.bf16.gmra.mxu0 %v146
  %v191 = vpop.f32.mrf.mxu0
  %v192 = vadd.f32 %v109, %v191
  %v193 = vpop.f32.mrf.mxu0
  %v194 = vpop.f32.mrf.mxu0
  %v195 = vadd.f32 %v112, %v194
  %v196 = vpop.f32.mrf.mxu0
  %197 = vmatprep.mubr.bf16.mxu0 0
  %198 = vmatmul.mubr.bf16.gmra.mxu0 %v149
  %v199 = vpop.f32.mrf.mxu0
  %v200 = vadd.f32 %v117, %v199
  %v201 = vpop.f32.mrf.mxu0
  %v202 = vpop.f32.mrf.mxu0
  %v203 = vadd.f32 %v120, %v202
  %v204 = vpop.f32.mrf.mxu0
  %205 = vmatprep.mubr.bf16.mxu0 0
  %206 = vmatmul.mubr.bf16.gmra.mxu0 %v152
  %v207 = vpop.f32.mrf.mxu0
  %v208 = vadd.f32 %v125, %v207
  %v209 = vpop.f32.mrf.mxu0
  %v210 = vpop.f32.mrf.mxu0
  %v211 = vadd.f32 %v128, %v210
  %v212 = vpop.f32.mrf.mxu0
  %213 = vmatprep.mubr.bf16.mxu0 0
  %214 = vmatmul.mubr.bf16.gmra.mxu0 %v155
  %v215 = vpop.f32.mrf.mxu0
  %v216 = vadd.f32 %v133, %v215
  %v217 = vpop.f32.mrf.mxu0
  %v218 = vpop.f32.mrf.mxu0
  %v219 = vadd.f32 %v136, %v218
  %v220 = vpop.f32.mrf.mxu0
  %221 = vdwg.mxu0
  %v222 = vld [vmem:[%s4] sm:$0x1]
  %v224 = vlaneseq
  %v225 = vshrl.u32 %v224, 7
  %v226 = vsub.s32 0, %v225
  %v227 = vrot.slane %v222, %v226
  %v229 = vadd.f32 %v192, %v227
  %v230 = vadd.f32 %v195, %v227
  %v231 = vadd.f32 %v200, %v227
  %v232 = vadd.f32 %v203, %v227
  %v233 = vadd.f32 %v208, %v227
  %v234 = vadd.f32 %v211, %v227
  %v235 = vadd.f32 %v216, %v227
  %v236 = vadd.f32 %v219, %v227
  %v237 = vmax.f32 %v229, 0.0
  %v238 = vmax.f32 %v230, 0.0
  %v239 = vmax.f32 %v231, 0.0
  %v240 = vmax.f32 %v232, 0.0
  %v241 = vmax.f32 %v233, 0.0
  %v242 = vmax.f32 %v234, 0.0
  %v243 = vmax.f32 %v235, 0.0
  %v244 = vmax.f32 %v236, 0.0
  %v245 = vpack.c.bf16 %v238, %v237
  %v246 = vpack.c.bf16 %v240, %v239
  %v247 = vpack.c.bf16 %v242, %v241
  %v248 = vpack.c.bf16 %v244, %v243
  %v249 = vld [vmem:[%s5] sm:$0xf]
  %v250 = vld [vmem:[%s5 + $0x4] sm:$0xf]
  %v251 = vld [vmem:[%s5 + $0x8] sm:$0xf]
  %v252 = vld [vmem:[%s5 + $0xc] sm:$0xf]
  %v253 = vld [vmem:[%s5 + $0x10] sm:$0xf]
  %v254 = vld [vmem:[%s5 + $0x14] sm:$0xf]
  %v255 = vld [vmem:[%s5 + $0x18] sm:$0xf]
  %v256 = vld [vmem:[%s5 + $0x1c] sm:$0xf]
  %v257 = vld [vmem:[%s5 + $0x20] sm:$0xf]
  %v258 = vld [vmem:[%s5 + $0x24] sm:$0xf]
  %v259 = vld [vmem:[%s5 + $0x28] sm:$0xf]
  %v260 = vld [vmem:[%s5 + $0x2c] sm:$0xf]
  %v261 = vld [vmem:[%s5 + $0x30] sm:$0xf]
  %v262 = vld [vmem:[%s5 + $0x34] sm:$0xf]
  %v263 = vld [vmem:[%s5 + $0x38] sm:$0xf]
  %v264 = vld [vmem:[%s5 + $0x3c] sm:$0xf]
  %v265 = vld [vmem:[%s6] sm:$0x1]
  %v267 = vlaneseq
  %v268 = vshrl.u32 %v267, 7
  %v269 = vsub.s32 0, %v268
  %v270 = vrot.slane %v265, %v269
  %v288 = vunpack.c.l.b16 %v249
  %v289 = vunpack.c.l.b16 %v250
  %v290 = vunpack.c.l.b16 %v251
  %v291 = vunpack.c.l.b16 %v252
  %v292 = vunpack.c.l.b16 %v253
  %v293 = vunpack.c.l.b16 %v254
  %v294 = vunpack.c.l.b16 %v255
  %v295 = vunpack.c.l.b16 %v256
  %v296 = vunpack.c.l.b16 %v257
  %v297 = vunpack.c.l.b16 %v258
  %v298 = vunpack.c.l.b16 %v259
  %v299 = vunpack.c.l.b16 %v260
  %v300 = vunpack.c.l.b16 %v261
  %v301 = vunpack.c.l.b16 %v262
  %v302 = vunpack.c.l.b16 %v263
  %v303 = vunpack.c.l.b16 %v264
  %v304 = vpack.c.b16 %v289, %v288
  %v305 = vpack.c.b16 %v291, %v290
  %v306 = vpack.c.b16 %v293, %v292
  %v307 = vpack.c.b16 %v295, %v294
  %v308 = vpack.c.b16 %v297, %v296
  %v309 = vpack.c.b16 %v299, %v298
  %v310 = vpack.c.b16 %v301, %v300
  %v311 = vpack.c.b16 %v303, %v302
  %320 = vmatprep.subr.bf16.mxu0 0
  %321 = vmatpush1.bf16.msra.mxu0 %v311
  %322 = vmatprep.subr.bf16.mxu0 0
  %323 = vmatpush1.bf16.msra.mxu0 %v310
  %324 = vmatprep.subr.bf16.mxu0 0
  %325 = vmatpush1.bf16.msra.mxu0 %v309
  %326 = vmatprep.subr.bf16.mxu0 0
  %327 = vmatpush1.bf16.msra.mxu0 %v308
  %328 = vmatprep.subr.bf16.mxu0 0
  %329 = vmatpush1.bf16.msra.mxu0 %v307
  %330 = vmatprep.subr.bf16.mxu0 0
  %331 = vmatpush1.bf16.msra.mxu0 %v306
  %332 = vmatprep.subr.bf16.mxu0 0
  %333 = vmatpush1.bf16.msra.mxu0 %v305
  %334 = vmatprep.subr.bf16.mxu0 0
  %335 = vmatpush1.bf16.msra.mxu0 %v304
  %336 = vmatprep.subr.bf16.mxu0 0
  %337 = vmatpush2.bf16.msra.mxu0 0
  %338 = vmatprep.subr.bf16.mxu0 0
  %339 = vmatpush2.bf16.msra.mxu0 0
  %340 = vmatprep.subr.bf16.mxu0 0
  %341 = vmatpush2.bf16.msra.mxu0 0
  %342 = vmatprep.subr.bf16.mxu0 0
  %343 = vmatpush2.bf16.msra.mxu0 0
  %344 = vmatprep.subr.bf16.mxu0 0
  %345 = vmatpush2.bf16.msra.mxu0 0
  %346 = vmatprep.subr.bf16.mxu0 0
  %347 = vmatpush2.bf16.msra.mxu0 0
  %348 = vmatprep.subr.bf16.mxu0 0
  %349 = vmatpush2.bf16.msra.mxu0 0
  %350 = vmatprep.subr.bf16.mxu0 0
  %351 = vmatpush2.bf16.msra.mxu0 0
  %352 = vmatprep.mubr.bf16.mxu0 0
  %353 = vmatmul.mubr.bf16.gmra.mxu0 %v245
  %v354 = vpop.f32.mrf.mxu0
  %v355 = vadd.f32 %v270, %v354
  %v356 = vpop.f32.mrf.mxu0
  %v357 = vpop.f32.mrf.mxu0
  %v358 = vadd.f32 %v270, %v357
  %v359 = vpop.f32.mrf.mxu0
  %360 = vmatprep.mubr.bf16.mxu0 0
  %361 = vmatmul.mubr.bf16.gmra.mxu0 %v246
  %v362 = vpop.f32.mrf.mxu0
  %v363 = vadd.f32 %v270, %v362
  %v364 = vpop.f32.mrf.mxu0
  %v365 = vpop.f32.mrf.mxu0
  %v366 = vadd.f32 %v270, %v365
  %v367 = vpop.f32.mrf.mxu0
  %368 = vmatprep.mubr.bf16.mxu0 0
  %369 = vmatmul.mubr.bf16.gmra.mxu0 %v247
  %v370 = vpop.f32.mrf.mxu0
  %v371 = vadd.f32 %v270, %v370
  %v372 = vpop.f32.mrf.mxu0
  %v373 = vpop.f32.mrf.mxu0
  %v374 = vadd.f32 %v270, %v373
  %v375 = vpop.f32.mrf.mxu0
  %376 = vmatprep.mubr.bf16.mxu0 0
  %377 = vmatmul.mubr.bf16.gmra.mxu0 %v248
  %v378 = vpop.f32.mrf.mxu0
  %v379 = vadd.f32 %v270, %v378
  %v380 = vpop.f32.mrf.mxu0
  %v381 = vpop.f32.mrf.mxu0
  %v382 = vadd.f32 %v270, %v381
  %v383 = vpop.f32.mrf.mxu0
  %384 = vdwg.mxu0
  %v385 = vmax.f32 %v355, 0.0
  %v386 = vmax.f32 %v358, 0.0
  %v387 = vmax.f32 %v363, 0.0
  %v388 = vmax.f32 %v366, 0.0
  %v389 = vmax.f32 %v371, 0.0
  %v390 = vmax.f32 %v374, 0.0
  %v391 = vmax.f32 %v379, 0.0
  %v392 = vmax.f32 %v382, 0.0
  %vm393 = vcmask 261120
  %394 = vst.msk [vmem:[%s7] sm:$0xff] %vm393, %v385
  %395 = vst.msk [vmem:[%s7 + $0x8] sm:$0xff] %vm393, %v386
  %396 = vst.msk [vmem:[%s7 + $0x10] sm:$0xff] %vm393, %v387
  %397 = vst.msk [vmem:[%s7 + $0x18] sm:$0xff] %vm393, %v388
  %398 = vst.msk [vmem:[%s7 + $0x20] sm:$0xff] %vm393, %v389
  %399 = vst.msk [vmem:[%s7 + $0x28] sm:$0xff] %vm393, %v390
  %400 = vst.msk [vmem:[%s7 + $0x30] sm:$0xff] %vm393, %v391
  %401 = vst.msk [vmem:[%s7 + $0x38] sm:$0xff] %vm393, %v392
  // Predicated region
  $region30: #{tpu_custom_call.1} parent=0 // pred_check
    _
  $region31: #{tpu_custom_call.1} parent=0 // pred_check_branch
    %403 = sbr.rel (0) target = $region33
  $region32: #{tpu_custom_call.1} parent=0 // pred_region
    _
  $region33: #{tpu_custom_call.1} parent=0 // pred_fallthru
    _
  // Predicated region
  $region34: #{tpu_custom_call.1} parent=0 // pred_check
    _
  $region35: #{tpu_custom_call.1} parent=0 // pred_check_branch
    %405 = sbr.rel (0) target = $region37
  $region36: #{tpu_custom_call.1} parent=0 // pred_region
    _
  $region37: #{tpu_custom_call.1} parent=0 // pred_fallthru
    _

</llo_original>
